<compile_context>
chip_gen: v7x
topology: tpu7x:2x2x1
jax: 0.10.0
libtpu: 0.0.40
codegen_flags: <defaults>
</compile_context>

<pallas_src>
import jax
import jax.numpy as jnp
from jax.experimental import pallas as pl
from jax.experimental.pallas import tpu as pltpu


def _pos_enc_kernel(x_ref, enc_ref, o_ref):
    # x_ref: (tb, tc), enc_ref: (1, tc), o_ref: (tb, tc).
    # Rank-matched sublane broadcast; pure VPU add (kernel is HBM-bound).
    o_ref[...] = x_ref[...] + enc_ref[...]


def _choose_tiles(B, F, itemsize, target_bytes=4 * 1024 * 1024):
    """Pick (row_tile, col_tile) for the (B, F) elementwise add.

    Prefers full-batch-tall tiles so the encoding is read from HBM exactly
    once, keeps column tiles multiples of 128 lanes, and rounds row tiles to
    the dtype's packed-sublane group (f32: 8, bf16: 16, int8/fp8: 32).
    """
    target_elems = max(1, target_bytes // itemsize)
    sub = 8 * max(1, 4 // itemsize)  # packed-sublane group for this dtype

    # Whole problem fits in one comfortable tile. Still split columns in two
    # (when lane-dense splitting is possible) so v7x's two TCs both get work.
    if B * F <= target_elems:
        if F >= 2 * 128:
            half = (((F + 1) // 2) + 127) // 128 * 128
            return B, min(F, half)
        return B, F

    # Preferred: full-batch rows; enc traffic collapses to a single pass.
    cols_budget = target_elems // B
    if cols_budget >= 128:
        return B, min(F, (cols_budget // 128) * 128)

    # B is extremely large: tile rows too, keeping columns lane-dense.
    tc = min(F, 128)
    rows = max(sub, (target_elems // tc // sub) * sub)
    return min(B, rows), tc


def learnable_positional_encoding(x, encoding, *, in_place=False):
    """x: (B, S, D); encoding: (max_len, D). Returns x + encoding[:S][None]."""
    B, S, D = x.shape
    max_len, d_model = encoding.shape
    if S > max_len:
        raise ValueError(
            f"seq_len {S} exceeds positional-encoding max_len {max_len}")
    if D != d_model:
        raise ValueError(f"d_model mismatch: x has {D}, encoding has {d_model}")

    F = S * D
    out_dtype = x.dtype  # intentional: keep activation dtype (see header note)

    # Glue: lane-dense 2D views; columns = S*D so main-tile stores are
    # full-lane even when D alone is not a multiple of 128.
    x2 = x.reshape(B, F)
    enc2 = encoding[:S, :].reshape(1, F).astype(out_dtype)

    tb, tc = _choose_tiles(B, F, jnp.dtype(out_dtype).itemsize)
    # Column-tile axis OUTER (parallel, megacore-sharded); row-tile axis INNER
    # (arbitrary/sequential) so enc's block index is constant across
    # consecutive steps and its re-DMA is elided.
    grid = (pl.cdiv(F, tc), pl.cdiv(B, tb))

    extra = {}
    if in_place:
        # Only pays off if the caller actually donates x under jit.
        extra["input_output_aliases"] = {0: 0}

    out2 = pl.pallas_call(
        _pos_enc_kernel,
        out_shape=jax.ShapeDtypeStruct((B, F), out_dtype),
        grid_spec=pltpu.PrefetchScalarGridSpec(
            num_scalar_prefetch=0,
            grid=grid,
            in_specs=[
                pl.BlockSpec((tb, tc), lambda j, i: (i, j)),  # x tile
                pl.BlockSpec((1, tc), lambda j, i: (0, j)),   # enc row slab
            ],
            out_specs=pl.BlockSpec((tb, tc), lambda j, i: (i, j)),
        ),
        compiler_params=pltpu.CompilerParams(
            dimension_semantics=("parallel", "arbitrary"),
            vmem_limit_bytes=32 * 1024 * 1024,
        ),
        **extra,
    )(x2, enc2)

    return out2.reshape(B, S, D)


if __name__ == "__main__":
    key = jax.random.PRNGKey(0)
    k_enc, k_x, k_enc2, k_x2 = jax.random.split(key, 4)

    # Case 1: module-default d_model=256 (lane-dense last dim), small B/S.
    d_model, max_len, B, S = 256, 16, 2, 8
    encoding = 0.1 * jax.random.normal(k_enc, (max_len, d_model), dtype=jnp.float32)
    x = jax.random.normal(k_x, (B, S, d_model), dtype=jnp.float32)

    out = jax.block_until_ready(learnable_positional_encoding(x, encoding))
    ref = x + encoding[:S, :][None, :, :]
    assert out.shape == (B, S, d_model)
    assert out.dtype == x.dtype
    assert jnp.allclose(out, ref, atol=1e-6), "mismatch vs reference (case 1)"

    # Case 2: awkward, non-128-multiple sizes exercise the full-extent block path.
    d_model2, max_len2, B2, S2 = 20, 9, 3, 7
    encoding2 = 0.1 * jax.random.normal(k_enc2, (max_len2, d_model2), dtype=jnp.float32)
    x_b = jax.random.normal(k_x2, (B2, S2, d_model2), dtype=jnp.float32)

    out_b = jax.block_until_ready(learnable_positional_encoding(x_b, encoding2))
    ref_b = x_b + encoding2[:S2, :][None, :, :]
    assert jnp.allclose(out_b, ref_b, atol=1e-6), "mismatch vs reference (case 2)"

    # Case 3: bf16 activations with f32 params — output stays bf16 (intentional).
    x_c = x.astype(jnp.bfloat16)
    out_c = jax.block_until_ready(learnable_positional_encoding(x_c, encoding))
    ref_c = (x_c + encoding[:S, :][None, :, :].astype(jnp.bfloat16)).astype(jnp.bfloat16)
    assert out_c.dtype == jnp.bfloat16
    assert jnp.allclose(out_c.astype(jnp.float32), ref_c.astype(jnp.float32),
                        atol=1e-2), "mismatch vs reference (case 3)"

    print("KERNEL_OK")
</pallas_src>

<mosaic_0001>
module attributes {stable_mosaic.version = 11 : i64} {
  func.func @_pos_enc_kernel(%arg0: i32, %arg1: i32, %arg2: memref<2x1024xf32, #tpu.memory_space<vmem>>, %arg3: memref<1x1024xf32, #tpu.memory_space<vmem>>, %arg4: memref<2x1024xf32, #tpu.memory_space<vmem>>) attributes {dimension_semantics = [#tpu.dimension_semantics<parallel>, #tpu.dimension_semantics<arbitrary>], iteration_bounds = array<i64: 2, 1>, scalar_prefetch = 0 : i64, scratch_operands = 0 : i64, tpu.core_type = #tpu.core_type<tc>, window_params = [{transform_indices = @transform_0, window_bounds = array<i64: 2, 1024>}, {transform_indices = @transform_1, window_bounds = array<i64: 1, 1024>}, {transform_indices = @transform_2, window_bounds = array<i64: 2, 1024>}]} {
    %c0 = arith.constant 0 : index
    %c0_0 = arith.constant 0 : index
    %0 = vector.load %arg2[%c0, %c0_0] : memref<2x1024xf32, #tpu.memory_space<vmem>>, vector<2x1024xf32>
    %c0_1 = arith.constant 0 : index
    %c0_2 = arith.constant 0 : index
    %1 = vector.load %arg3[%c0_1, %c0_2] : memref<1x1024xf32, #tpu.memory_space<vmem>>, vector<1x1024xf32>
    %2 = vector.broadcast %1 : vector<1x1024xf32> to vector<2x1024xf32>
    %3 = arith.addf %0, %2 : vector<2x1024xf32>
    %c0_3 = arith.constant 0 : index
    %c0_4 = arith.constant 0 : index
    %4 = vector.load %arg4[%c0_3, %c0_4] : memref<2x1024xf32, #tpu.memory_space<vmem>>, vector<2x1024xf32>
    tpu.vector_store %arg4[%c0_3, %c0_4], %3 {strides = array<i32>} : memref<2x1024xf32, #tpu.memory_space<vmem>>, vector<2x1024xf32>,
    return
  }
  func.func @transform_0(%arg0: i32, %arg1: i32) -> (i32, i32) {
    %c0_i32 = arith.constant 0 : i32
    return %arg1, %arg0 : i32, i32
  }
  func.func @transform_1(%arg0: i32, %arg1: i32) -> (i32, i32) {
    %c0_i32 = arith.constant 0 : i32
    %c0_i32_0 = arith.constant 0 : i32
    return %c0_i32, %arg0 : i32, i32
  }
  func.func @transform_2(%arg0: i32, %arg1: i32) -> (i32, i32) {
    %c0_i32 = arith.constant 0 : i32
    return %arg1, %arg0 : i32, i32
  }
}

</mosaic_0001>

<llo_original>
// kernel: tpu_custom_call.1
$region0: #{tpu_custom_call.1}
  #allocation0 [shape = 'u32[]', space=smem, size = 0x4, offset = 0x4, fixed_abs, tag = 'smem constant byte address 0x4 - core index']
  #allocation1 [shape = 'u32[144,128]{1,0:T(1,128)}', space=vmem, size = 0x12000, scoped, tag = 'internal scratch']
  %s0 = inlined_call_operand.hbm [shape: f32[2,2048], index: 0, kind: input, shape index: {}]
  %s1 = inlined_call_operand.hbm [shape: f32[1,2048], index: 1, kind: input, shape index: {}]
  %s2 = inlined_call_operand.hbm [shape: f32[2,2048], index: 2, kind: output, shape index: {}]
  %s3 = sld [smem:[#allocation0]]
  $region49: #{tpu_custom_call.1} parent=0
    _
  %s5 = ssub.s32 1, %s3
  %s6 = scalar_select 0, %s5, %s3
  $region1: #{tpu_custom_call.1} parent=0
    #allocation2 [shape = 'u8[16384]{0}', space=vmem, size = 0x4000, scoped, tag = 'input window, operand 0']
    #allocation3 [shape = 's32[2]{0}', space=sflag, size = 0x8, scoped, tag = 'scoped memory for tpu_custom_call.1']
    #allocation4 [shape = 's32[2]{0}', space=sflag, size = 0x8, scoped, tag = 'scoped memory for tpu_custom_call.1']
    #allocation5 [shape = 'u8[8192]{0}', space=vmem, size = 0x2000, scoped, tag = 'input window, operand 1']
    #allocation6 [shape = 's32[2]{0}', space=sflag, size = 0x8, scoped, tag = 'scoped memory for tpu_custom_call.1']
    #allocation7 [shape = 'u8[16384]{0}', space=vmem, size = 0x4000, scoped, tag = 'output window, operand 0']
    %7 = vsyncpa [#allocation3], 0
    %s8 = scalar_lea.sflag [#allocation3], 1
    %9 = vsyncpa %s8, 0
    %10 = vsyncpa [#allocation6], 0
    %s11 = scalar_lea.sflag [#allocation6], 1
    %12 = vsyncpa %s11, 0
    %13 = vsyncpa [#allocation4], 0
    %s14 = scalar_lea.sflag [#allocation4], 1
    %15 = vsyncpa %s14, 0
    loop: start=0, step=1, limit=4
    $region2: #{tpu_custom_call.1} parent=1 // loop_pre_header
      _
    $region3: #{tpu_custom_call.1} parent=1 // loop_header
      %s17 = sphi 0, %s21
      %p18 = scmp.ge.s32.totalorder %s17, 4
      %s24 = sphi 0, %s36
      %s25 = sphi 0, %s32
      %s26 = sphi 0, %s24
      %s27 = sphi 0, %s25
      %s28 = sphi 0, %s26
      %s29 = sphi 0, %s27
      %s41 = sphi 0, %s43
      %s44 = sphi 0, %s41
      %s45 = sphi 0, %s44
      %s61 = sphi 0, %s45
      %s67 = sphi 0, %s69
      %s70 = sphi 0, %s67
      %s71 = sphi 0, %s70
      %s87 = sphi 0, %s71
      %s95 = sphi 0, %s97
      %s98 = sphi 0, %s95
      %s99 = sphi 0, %s98
      %s115 = sphi 0, %s99
    $region4: #{tpu_custom_call.1} parent=1 // loop_header_branch
      %20 = sbr.rel (%p18) target = $region8
    $region5: #{tpu_custom_call.1} parent=1 // loop_body
      %s22 = ssub.s32 %s17, 1
      %s23 = ssub.s32 %s17, 2
      %s30 = sadd.s32 1, %s25
      %p31 = scmp.ge.s32.totalorder %s30, 1
      %s32 = scalar_select %p31, 0, %s30
      %s33 = sadd.s32 1, %s24
      %s34 = scalar_select %p31, %s33, %s24
      %p35 = scmp.ge.s32.totalorder %s34, 2
      %s36 = scalar_select %p35, 0, %s34
      %s37 = ssub.s32 %s25, %s32
      %s38 = ssub.s32 %s24, %s36
      %s39 = sor.u32 %s37, %s38
      %p40 = scmp.eq.s32.totalorder %s39, 0
      %s42 = sadd.s32 %s41, 1
      %s43 = scalar_select %p40, %s41, %s42
      %p46 = pneg %p40
      %p47 = scmp.eq.s32.totalorder %s17, 1
      %p48 = por %p46, %p47
      %p49 = scmp.ne.s32.totalorder %s41, %s44
      %p50 = scmp.eq.s32.totalorder %s17, 0
      %p51 = por %p49, %p50
      %p52 = scmp.ne.s32.totalorder %s41, %s44
      %p53 = scmp.eq.s32.totalorder %s22, 1
      %p54 = por %p52, %p53
      %p55 = scmp.ne.s32.totalorder %s44, %s45
      %p56 = scmp.eq.s32.totalorder %s22, 0
      %p57 = por %p55, %p56
      %p58 = scmp.ne.s32.totalorder %s44, %s45
      %p59 = scmp.eq.s32.totalorder %s23, 1
      %p60 = por %p58, %p59
      %p62 = scmp.ne.s32.totalorder %s45, %s61
      %p63 = scmp.eq.s32.totalorder %s23, 0
      %p64 = por %p62, %p63
      %s65 = ssub.s32 %s24, %s36
      %p66 = scmp.eq.s32.totalorder %s65, 0
      %s68 = sadd.s32 %s67, 1
      %s69 = scalar_select %p66, %s67, %s68
      %p72 = pneg %p66
      %p73 = scmp.eq.s32.totalorder %s17, 1
      %p74 = por %p72, %p73
      %p75 = scmp.ne.s32.totalorder %s67, %s70
      %p76 = scmp.eq.s32.totalorder %s17, 0
      %p77 = por %p75, %p76
      %p78 = scmp.ne.s32.totalorder %s67, %s70
      %p79 = scmp.eq.s32.totalorder %s22, 1
      %p80 = por %p78, %p79
      %p81 = scmp.ne.s32.totalorder %s70, %s71
      %p82 = scmp.eq.s32.totalorder %s22, 0
      %p83 = por %p81, %p82
      %p84 = scmp.ne.s32.totalorder %s70, %s71
      %p85 = scmp.eq.s32.totalorder %s23, 1
      %p86 = por %p84, %p85
      %p88 = scmp.ne.s32.totalorder %s71, %s87
      %p89 = scmp.eq.s32.totalorder %s23, 0
      %p90 = por %p88, %p89
      %s91 = ssub.s32 %s25, %s32
      %s92 = ssub.s32 %s24, %s36
      %s93 = sor.u32 %s91, %s92
      %p94 = scmp.eq.s32.totalorder %s93, 0
      %s96 = sadd.s32 %s95, 1
      %s97 = scalar_select %p94, %s95, %s96
      %p100 = pneg %p94
      %p101 = scmp.eq.s32.totalorder %s17, 1
      %p102 = por %p100, %p101
      %p103 = scmp.ne.s32.totalorder %s95, %s98
      %p104 = scmp.eq.s32.totalorder %s17, 0
      %p105 = por %p103, %p104
      %p106 = scmp.ne.s32.totalorder %s95, %s98
      %p107 = scmp.eq.s32.totalorder %s22, 1
      %p108 = por %p106, %p107
      %p109 = scmp.ne.s32.totalorder %s98, %s99
      %p110 = scmp.eq.s32.totalorder %s22, 0
      %p111 = por %p109, %p110
      %p112 = scmp.ne.s32.totalorder %s98, %s99
      %p113 = scmp.eq.s32.totalorder %s23, 1
      %p114 = por %p112, %p113
      %p116 = scmp.ne.s32.totalorder %s99, %s115
      %p117 = scmp.eq.s32.totalorder %s23, 0
      %p118 = por %p116, %p117
      %p119 = scmp.le.s32.totalorder 1, %s17
      %p120 = scmp.lt.s32.totalorder %s17, 3
      %p121 = pnand %p119, %p120
      %p122 = pneg %p121
      // Predicated region
      $region9: #{tpu_custom_call.1} parent=5 // pred_check
        _
      $region10: #{tpu_custom_call.1} parent=5 // pred_check_branch
        %124 = sbr.rel (%p121) target = $region12
      $region11: #{tpu_custom_call.1} parent=5 // pred_region
        %s125 = ssub.s32 %s17, 1
      $region12: #{tpu_custom_call.1} parent=5 // pred_fallthru
        _
      %p126 = scmp.lt.s32.totalorder %s17, 2
      // Predicated region
      $region13: #{tpu_custom_call.1} parent=5 // pred_check
        %p127 = pneg %p126
      $region14: #{tpu_custom_call.1} parent=5 // pred_check_branch
        %129 = sbr.rel (%p127) target = $region16
      $region15: #{tpu_custom_call.1} parent=5 // pred_region
        // Predicated region
        $region17: #{tpu_custom_call.1} parent=15 // pred_check
          %p130 = pneg %p51
        $region18: #{tpu_custom_call.1} parent=15 // pred_check_branch
          %132 = sbr.rel (%p130) target = $region20
        $region19: #{tpu_custom_call.1} parent=15 // pred_region
          %s133 = sand.u32 %s41, 1
          %s134 = scalar_lea.sflag [#allocation3], %s133
          %s135 = sand.u32 %s41, 1
          %s136 = smul.addr %s135, 16
          %s137 = scalar_lea.vmem [#allocation2], %s136
          %s138 = smul.u32 8, %s24
          %s140 = ssub.s32 256, 256
          %141 = vsyncadd %s134, %s140
          %s142 = smul.addr %s25, 16
          %s143 = sadd.s32 %s138, %s142
          %s144 = smul.addr %s143, 32
          %s145 = scalar_lea.hbm %s0, %s144
          %s147 = sshll.u32 %s137, 4
          %s148 = int_to_ptr.vmem [resolvable:$true] %s147
          %150 = dma.hbm_to_vmem [thread:$0]  %s145, 256, %s148, %s134
        $region20: #{tpu_custom_call.1} parent=15 // pred_fallthru
          _
        // Predicated region
        $region21: #{tpu_custom_call.1} parent=15 // pred_check
          %p151 = pneg %p77
        $region22: #{tpu_custom_call.1} parent=15 // pred_check_branch
          %153 = sbr.rel (%p151) target = $region24
        $region23: #{tpu_custom_call.1} parent=15 // pred_region
          %s154 = sand.u32 %s67, 1
          %s155 = scalar_lea.sflag [#allocation6], %s154
          %s156 = sand.u32 %s67, 1
          %s157 = smul.addr %s156, 8
          %s158 = scalar_lea.vmem [#allocation5], %s157
          %s159 = smul.u32 8, %s24
          %s161 = ssub.s32 128, 128
          %162 = vsyncadd %s155, %s161
          %s163 = smul.addr %s159, 16
          %s164 = scalar_lea.hbm %s1, %s163
          %s166 = sshll.u32 %s158, 4
          %s167 = int_to_ptr.vmem [resolvable:$true] %s166
          %169 = dma.hbm_to_vmem [thread:$0]  %s164, 128, %s167, %s155
        $region24: #{tpu_custom_call.1} parent=15 // pred_fallthru
          _
      $region16: #{tpu_custom_call.1} parent=5 // pred_fallthru
        _
      %p170 = scmp.le.s32.totalorder 1, %s17
      %p171 = scmp.lt.s32.totalorder %s17, 3
      %p172 = pnand %p170, %p171
      %p173 = pneg %p172
      // Predicated region
      $region25: #{tpu_custom_call.1} parent=5 // pred_check
        _
      $region26: #{tpu_custom_call.1} parent=5 // pred_check_branch
        %175 = sbr.rel (%p172) target = $region28
      $region27: #{tpu_custom_call.1} parent=5 // pred_region
        %s176 = ssub.s32 %s17, 1
        %s177 = sand.u32 %s44, 1
        %s178 = scalar_lea.sflag [#allocation3], %s177
        %s179 = sand.u32 %s44, 1
        %s180 = smul.addr %s179, 16
        %s181 = scalar_lea.vmem [#allocation2], %s180
        // Predicated region
        $region29: #{tpu_custom_call.1} parent=27 // pred_check
          %p182 = pneg %p57
        $region30: #{tpu_custom_call.1} parent=27 // pred_check_branch
          %184 = sbr.rel (%p182) target = $region32
        $region31: #{tpu_custom_call.1} parent=27 // pred_region
          %185 = dma.done %s178, 256
        $region32: #{tpu_custom_call.1} parent=27 // pred_fallthru
          _
        %s186 = sand.u32 %s70, 1
        %s187 = scalar_lea.sflag [#allocation6], %s186
        %s188 = sand.u32 %s70, 1
        %s189 = smul.addr %s188, 8
        %s190 = scalar_lea.vmem [#allocation5], %s189
        // Predicated region
        $region33: #{tpu_custom_call.1} parent=27 // pred_check
          %p191 = pneg %p83
        $region34: #{tpu_custom_call.1} parent=27 // pred_check_branch
          %193 = sbr.rel (%p191) target = $region36
        $region35: #{tpu_custom_call.1} parent=27 // pred_region
          %194 = dma.done %s187, 128
        $region36: #{tpu_custom_call.1} parent=27 // pred_fallthru
          _
        %s195 = sand.u32 %s44, 1
        %s196 = scalar_lea.sflag [#allocation3], %s195
        %s197 = sand.u32 %s44, 1
        %s198 = smul.addr %s197, 16
        %s199 = scalar_lea.vmem [#allocation2], %s198
        %p200 = pneg %p57
        %p201 = pneg %p54
        %s202 = sand.u32 %s70, 1
        %s203 = scalar_lea.sflag [#allocation6], %s202
        %s204 = sand.u32 %s70, 1
        %s205 = smul.addr %s204, 8
        %s206 = scalar_lea.vmem [#allocation5], %s205
        %p207 = pneg %p83
        %p208 = pneg %p80
        %p209 = pneg %p111
        %p210 = pneg %p108
        %s211 = sand.u32 %s98, 1
        %s212 = scalar_lea.sflag [#allocation4], %s211
        %s213 = sand.u32 %s98, 1
        %s214 = smul.addr %s213, 16
        %s215 = scalar_lea.vmem [#allocation7], %s214
        %s216 = smul.u32 8, %s26
        %s217 = smul.u32 8, %s26
        %s218 = smul.u32 8, %s26
        %v219 = vld [vmem:[%s181] sm:$0xff]
        %v220 = vld [vmem:[%s181 + $0x8] sm:$0xff]
        %v221 = vld [vmem:[%s190] sm:$0xff]
        %v223 = vlaneseq
        %v224 = vshrl.u32 %v223, 7
        %v225 = vsub.s32 0, %v224
        %v226 = vrot.slane %v221, %v225
        %v227 = vlaneseq
        %v228 = vshrl.u32 %v227, 7
        %v229 = vsub.s32 1, %v228
        %v230 = vrot.slane %v221, %v229
        %v231 = vlaneseq
        %v232 = vshrl.u32 %v231, 7
        %v233 = vsub.s32 2, %v232
        %v234 = vrot.slane %v221, %v233
        %v235 = vlaneseq
        %v236 = vshrl.u32 %v235, 7
        %v237 = vsub.s32 3, %v236
        %v238 = vrot.slane %v221, %v237
        %v239 = vlaneseq
        %v240 = vshrl.u32 %v239, 7
        %v241 = vsub.s32 4, %v240
        %v242 = vrot.slane %v221, %v241
        %v243 = vlaneseq
        %v244 = vshrl.u32 %v243, 7
        %v245 = vsub.s32 5, %v244
        %v246 = vrot.slane %v221, %v245
        %v247 = vlaneseq
        %v248 = vshrl.u32 %v247, 7
        %v249 = vsub.s32 6, %v248
        %v250 = vrot.slane %v221, %v249
        %v251 = vlaneseq
        %v252 = vshrl.u32 %v251, 7
        %v253 = vsub.s32 7, %v252
        %v254 = vrot.slane %v221, %v253
        %v255 = vcombine.low %v226, %v230
        %v256 = vcombine.low %v234, %v238
        %v258 = vunpack.c.l.s4 1983009808
        %v259 = vunpack.c.0.s8 %v258
        %v260 = vlaneseq
        %v261 = vshrl.u32 %v260, 7
        %v262 = vsub.s32 %v259, %v261
        %v263 = vrot.slane %v255, %v262
        %v265 = vunpack.c.l.s4 1983009808
        %v266 = vunpack.c.0.s8 %v265
        %v267 = vlaneseq
        %v268 = vshrl.u32 %v267, 7
        %v269 = vsub.s32 %v266, %v268
        %v270 = vrot.slane %v256, %v269
        %v271 = vcombine.low %v263, %v270
        %v272 = vcombine.low %v242, %v246
        %v273 = vcombine.low %v250, %v254
        %v275 = vunpack.c.l.s4 1983009808
        %v276 = vunpack.c.0.s8 %v275
        %v277 = vlaneseq
        %v278 = vshrl.u32 %v277, 7
        %v279 = vsub.s32 %v276, %v278
        %v280 = vrot.slane %v272, %v279
        %v282 = vunpack.c.l.s4 1983009808
        %v283 = vunpack.c.0.s8 %v282
        %v284 = vlaneseq
        %v285 = vshrl.u32 %v284, 7
        %v286 = vsub.s32 %v283, %v285
        %v287 = vrot.slane %v273, %v286
        %v288 = vcombine.low %v280, %v287
        %v291 = vadd.f32 %v219, %v271
        %v292 = vadd.f32 %v220, %v288
        %293 = vst [vmem:[%s215] sm:$0xff] %v291
        %294 = vst [vmem:[%s215 + $0x8] sm:$0xff] %v292
        %s295 = sand.u32 %s98, 1
        %s296 = scalar_lea.sflag [#allocation4], %s295
        %s297 = sand.u32 %s98, 1
        %s298 = smul.addr %s297, 16
        %s299 = scalar_lea.vmem [#allocation7], %s298
        // Predicated region
        $region37: #{tpu_custom_call.1} parent=27 // pred_check
          %p300 = pneg %p108
        $region38: #{tpu_custom_call.1} parent=27 // pred_check_branch
          %302 = sbr.rel (%p300) target = $region40
        $region39: #{tpu_custom_call.1} parent=27 // pred_region
          %s303 = smul.u32 8, %s26
          %s305 = ssub.s32 256, 256
          %306 = vsyncadd %s296, %s305
          %s307 = smul.addr %s27, 16
          %s308 = sadd.s32 %s303, %s307
          %s309 = smul.addr %s308, 32
          %s310 = scalar_lea.hbm %s2, %s309
          %s312 = sshll.u32 %s299, 4
          %s313 = int_to_ptr.vmem [resolvable:$true] %s312
          %315 = dma.vmem_to_hbm [thread:$0]  %s313, 256, %s310, %s296
        $region40: #{tpu_custom_call.1} parent=27 // pred_fallthru
          _
      $region28: #{tpu_custom_call.1} parent=5 // pred_fallthru
        _
      %p316 = scmp.le.s32.totalorder 2, %s17
      // Predicated region
      $region41: #{tpu_custom_call.1} parent=5 // pred_check
        %p317 = pneg %p316
      $region42: #{tpu_custom_call.1} parent=5 // pred_check_branch
        %319 = sbr.rel (%p317) target = $region44
      $region43: #{tpu_custom_call.1} parent=5 // pred_region
        %s320 = ssub.s32 %s17, 2
        // Predicated region
        $region45: #{tpu_custom_call.1} parent=43 // pred_check
          %p321 = pneg %p114
        $region46: #{tpu_custom_call.1} parent=43 // pred_check_branch
          %323 = sbr.rel (%p321) target = $region48
        $region47: #{tpu_custom_call.1} parent=43 // pred_region
          %s324 = sand.u32 %s99, 1
          %s325 = scalar_lea.sflag [#allocation4], %s324
          %s326 = sand.u32 %s99, 1
          %s327 = smul.addr %s326, 16
          %s328 = scalar_lea.vmem [#allocation7], %s327
          %329 = dma.done %s325, 256
        $region48: #{tpu_custom_call.1} parent=43 // pred_fallthru
          _
      $region44: #{tpu_custom_call.1} parent=5 // pred_fallthru
        _
    $region6: #{tpu_custom_call.1} parent=1 // loop_footer
      %s21 = sadd.s32 1, %s17
    $region7: #{tpu_custom_call.1} parent=1 // loop_footer_branch
      %16 = sbr.rel target = $region3
    $region8: #{tpu_custom_call.1} parent=1 // loop_exit
      _
    %330 = vsyncpa [#allocation3], 1
    %s331 = scalar_lea.sflag [#allocation3], 1
    %332 = vsyncpa %s331, 1
    %333 = vsyncpa [#allocation6], 1
    %s334 = scalar_lea.sflag [#allocation6], 1
    %335 = vsyncpa %s334, 1
    %336 = vsyncpa [#allocation4], 1
    %s337 = scalar_lea.sflag [#allocation4], 1
    %338 = vsyncpa %s337, 1

</llo_original>
